<compile_context>
chip_gen: v6e
topology: v6e:2x2x1
jax: 0.10.0
libtpu: 0.0.40
codegen_flags: <defaults>
</compile_context>

<pallas_src>
import jax
import jax.numpy as jnp
from jax.experimental import pallas as pl
from jax.experimental.pallas import tpu as pltpu


def _hbm_copy_kernel(x_hbm, o_hbm, sem):
    # Single contiguous HBM->HBM DMA: no VMEM staging, no grid, no per-tile
    # overhead.  One DMA descriptor running at full HBM bandwidth on every
    # TPU generation.
    cp = pltpu.make_async_copy(x_hbm, o_hbm, sem)
    cp.start()
    cp.wait()


@jax.jit
def _identity_via_dma(x):
    return pl.pallas_call(
        _hbm_copy_kernel,
        out_shape=jax.ShapeDtypeStruct(x.shape, x.dtype),
        in_specs=[pl.BlockSpec(memory_space=pl.ANY)],
        out_specs=pl.BlockSpec(memory_space=pl.ANY),
        scratch_shapes=[pltpu.SemaphoreType.DMA(())],
        compiler_params=pltpu.CompilerParams(has_side_effects=True),
    )(x)


def decoder_forward(x, latent_dim, output_dim, *, use_pallas=False):
    """Pallas equivalent of Decoder.forward.

    The reference forward is unimplemented, so the result is the latent input
    unchanged (identity).  By default no kernel is launched at all (zero-cost
    pass-through).  With use_pallas=True the identity is materialized through
    a single HBM->HBM DMA Pallas kernel, kept only so the kernel path can be
    exercised / tested.  `latent_dim` / `output_dim` are carried only as
    module attributes, exactly like the PyTorch __init__ (no parameters).
    """
    assert x.ndim >= 1 and x.shape[-1] == latent_dim
    del output_dim  # stored attribute only; unused by the reference forward

    if not use_pallas:
        # Highest-value optimization: skip the kernel entirely.
        return x
    return _identity_via_dma(x)


if __name__ == "__main__":
    latent_dim = 32
    output_dim = 64  # stored attribute only; unused by the reference forward

    key = jax.random.PRNGKey(0)
    k1, k2 = jax.random.split(key)

    # Small, module-consistent latent input.
    x_small = jax.random.normal(k1, (2, latent_dim), dtype=jnp.float32)

    # Default path: pure pass-through, no kernel launch.
    out_fast = decoder_forward(x_small, latent_dim, output_dim)
    assert out_fast.shape == x_small.shape and out_fast.dtype == x_small.dtype
    assert bool(jnp.allclose(out_fast, x_small))

    # Pallas path (single HBM->HBM DMA) — proves the kernel compiles & runs.
    out_kernel = jax.block_until_ready(
        decoder_forward(x_small, latent_dim, output_dim, use_pallas=True))
    assert out_kernel.shape == x_small.shape and out_kernel.dtype == x_small.dtype
    assert bool(jnp.allclose(out_kernel, x_small))

    # Slightly larger batch through the DMA kernel as well.
    x_big = jax.random.normal(k2, (256, latent_dim), dtype=jnp.float32)
    out_big = jax.block_until_ready(
        decoder_forward(x_big, latent_dim, output_dim, use_pallas=True))
    assert out_big.shape == x_big.shape and out_big.dtype == x_big.dtype
    assert bool(jnp.allclose(out_big, x_big))

    print("KERNEL_OK")
</pallas_src>

<mosaic_0001>
module attributes {stable_mosaic.version = 11 : i64} {
  func.func @_hbm_copy_kernel(%arg0: memref<2x32xf32, #tpu.memory_space<any>>, %arg1: memref<2x32xf32, #tpu.memory_space<any>>, %arg2: memref<!tpu.dma_semaphore, #tpu.memory_space<semaphore_mem>>) attributes {dimension_semantics = [], scalar_prefetch = 0 : i64, scratch_operands = 1 : i64, tpu.core_type = #tpu.core_type<tc>} {
    tpu.enqueue_dma source(%arg0 : memref<2x32xf32, #tpu.memory_space<any>>) target(%arg1 : memref<2x32xf32, #tpu.memory_space<any>>) target_semaphore(%arg2 : memref<!tpu.dma_semaphore, #tpu.memory_space<semaphore_mem>>)
    tpu.wait_dma2 semaphore(%arg2 : memref<!tpu.dma_semaphore, #tpu.memory_space<semaphore_mem>>) src(%arg0 : memref<2x32xf32, #tpu.memory_space<any>>) dst(%arg1 : memref<2x32xf32, #tpu.memory_space<any>>)
    return
  }
}

</mosaic_0001>

<llo_original>
// kernel: _identity_via_dma.1
$region0: #{_identity_via_dma.1}
  #allocation0 [shape = 'u32[]', space=smem, size = 0x4, offset = 0x4, fixed_abs, tag = 'smem constant byte address 0x4 - core index']
  #allocation1 [shape = 'u32[144,128]{1,0:T(1,128)}', space=vmem, size = 0x12000, scoped, tag = 'internal scratch']
  #allocation2 [shape = 's32[1]{0}', space=sflag, size = 0x4, scoped, tag = 'scratch operand']
  #allocation3 [shape = 's32[]', space=sflag, size = 0x4, offset = 0, fixed_abs, tag = 'sflag constant byte address 0x0 - dummy sync flag']
  #allocation4 [shape = 'u32[0]{0}', space=smem, size = 0, offset = 0, fixed_abs, tag = 'smem constant byte address 0x0 - null']
  %s0 = inlined_call_operand.hbm [shape: f32[2,32], index: 0, kind: input, shape index: {}]
  %s1 = inlined_call_operand.hbm [shape: f32[2,32], index: 1, kind: output, shape index: {}]
  %s2 = sld [smem:[#allocation0]]
  $region2: #{_identity_via_dma.1} parent=0
    _
  %s4 = ssub.s32 1, %s2
  %s5 = scalar_select 0, %s4, %s2
  %s7 = sshll.u32 1, 14
  %s8 = sxor.u32 4294967295, %s7
  %12 = dma.general %s0, 32, %s1, [#allocation2], 131072, [#allocation4], 0, 0
  %s13 = smul.u32 2, 1
  %s14 = sshll.u32 %s13, 4
  %15 = dma.done [#allocation2], %s14
  %16 = vsyncmov [#allocation2]
  %s17 = vpop.sfrf %16
  %p18 = scmp.eq.s32.totalorder %s17, 0
  %p19 = pneg %p18
  %21 = shalt.err (%p19)

</llo_original>
